<compile_context>
chip_gen: v7x
topology: tpu7x:2x2x1
jax: 0.10.0
libtpu: 0.0.40
codegen_flags: <defaults>
</compile_context>

<pallas_src>
import functools

import jax
import jax.numpy as jnp
from jax.experimental import pallas as pl
from jax.experimental.pallas import tpu as pltpu


def _round_up(x, m):
    return ((x + m - 1) // m) * m


def _vmem_capacity_bytes():
    # Per-TensorCore VMEM; conservative 64 MiB (v7x) fallback if the query fails.
    try:
        cap = getattr(pltpu.get_tpu_info(), "vmem_capacity_bytes", None)
        if cap:
            return int(min(int(cap), 128 << 20))
    except Exception:
        pass
    return 64 << 20


def _self_output_kernel(hs_ref, res_ref, w_ref, b_ref, o_ref, *, compute_dtype):
    # hs_ref : (tm, Hp)  activations tile, streamed in its native dtype
    # res_ref: (tm, tn)  residual tile
    # w_ref  : (Hp, tn)  dense weight block, layout [in, out], compute dtype
    # b_ref  : (1, tn)   bias block, f32
    # o_ref  : (tm, tn)  output tile
    a = hs_ref[...]
    if a.dtype != compute_dtype:
        a = a.astype(compute_dtype)       # in-kernel downcast: no extra HBM pass
    acc = jnp.dot(a, w_ref[...], preferred_element_type=jnp.float32)
    acc = acc + b_ref[...] + res_ref[...].astype(jnp.float32)
    o_ref[...] = acc.astype(o_ref.dtype)


def groupbert_self_output(hidden_states, input_tensor, weight_t, bias, *,
                          compute_dtype=None, _tm=None, _tn=None,
                          _force_tiled=False):
    """y = hidden_states @ weight_t + bias + input_tensor  (dropout = identity).

    hidden_states, input_tensor: [B, S, H]; weight_t: [H, H] (layout [in, out]);
    bias: [H].  compute_dtype: MXU streaming dtype (default bf16 for f32 inputs;
    v5e has no fast f32 MXU path).  Accumulation, bias and residual add are f32.
    Note: with f32 streaming the MXU may still use reduced-precision passes at
    default dot precision; tolerances in tests reflect that.
    """
    B, S, H = hidden_states.shape
    M = B * S
    out_dtype = hidden_states.dtype

    if compute_dtype is None:
        compute_dtype = (jnp.bfloat16
                         if jnp.dtype(out_dtype) == jnp.dtype(jnp.float32)
                         else out_dtype)
    compute_dtype = jnp.dtype(compute_dtype)

    in_bytes = jnp.dtype(hidden_states.dtype).itemsize
    res_bytes = jnp.dtype(input_tensor.dtype).itemsize
    out_bytes = jnp.dtype(out_dtype).itemsize
    cbytes = compute_dtype.itemsize

    vmem_cap = _vmem_capacity_bytes()
    budget = max(16 << 20, vmem_cap - (8 << 20))   # headroom for Mosaic scratch

    # Sub-32-bit tiles pack 2 rows per sublane: keep row tiles multiple of 16.
    align = 16 if min(in_bytes, res_bytes, out_bytes, cbytes) < 4 else 8

    # Lane-dense output; pad H only when not already 128-aligned (standard BERT
    # sizes pass straight through with zero extra HBM passes).
    Hp = H if H % 128 == 0 else _round_up(H, 128)

    # Balanced row tile: last tile mostly full, bounded by base_tm.
    base_tm = 1024 if cbytes < 4 else 512
    if _tm is not None:
        tm = int(_tm)
    elif M <= base_tm:
        tm = M                                       # full-extent block, any M
    else:
        tm = _round_up(pl.cdiv(M, pl.cdiv(M, base_tm)), align)

    weight_resident = (not _force_tiled) and (Hp * Hp * cbytes) <= (8 << 20)

    if weight_resident:
        tn = Hp

        def footprint(tm_):
            return (2 * tm_ * Hp * (in_bytes + res_bytes + out_bytes + 4)
                    + 2 * Hp * Hp * cbytes + 2 * Hp * 4)
    else:
        if _tn is not None:
            tn = int(_tn)
        elif Hp % 512 == 0:
            tn = 512
        elif Hp % 256 == 0:
            tn = 256
        else:
            tn = 128

        def footprint(tm_):
            return (2 * tm_ * Hp * in_bytes
                    + 2 * tm_ * tn * (res_bytes + out_bytes + 4)
                    + 2 * Hp * tn * cbytes + 2 * tn * 4)

    # Shrink only the row tile (never the lane-dense output width) until the
    # double-buffered footprint fits VMEM (64 MiB/TC on v7x, 128 MiB v5e/v6e).
    if _tm is None:
        while tm > align and footprint(tm) > budget:
            tm = max(align, _round_up(tm // 2, align))
    Mp = _round_up(M, tm)

    # ---- operand prep: only the small weight/bias are cast in the wrapper ----
    hs2d = hidden_states.reshape(M, H)
    res2d = input_tensor.reshape(M, H)
    w = weight_t if weight_t.dtype == compute_dtype else weight_t.astype(compute_dtype)
    b = bias.astype(jnp.float32).reshape(1, H)
    if Mp != M or Hp != H:   # rare fallback (non-aligned H or ragged M)
        hs2d = jnp.pad(hs2d, ((0, Mp - M), (0, Hp - H)))
        res2d = jnp.pad(res2d, ((0, Mp - M), (0, Hp - H)))
        w = jnp.pad(w, ((0, Hp - H), (0, Hp - H)))
        b = jnp.pad(b, ((0, 0), (0, Hp - H)))

    n_i = Mp // tm

    if weight_resident:
        # 1-D grid over row tiles; weight DMAed exactly once, megacore shards
        # rows so each TensorCore streams disjoint halves of the big tensors.
        grid = (n_i,)
        in_specs = [
            pl.BlockSpec((tm, Hp), lambda i: (i, 0)),    # activations (native dtype)
            pl.BlockSpec((tm, Hp), lambda i: (i, 0)),    # residual
            pl.BlockSpec((Hp, Hp), lambda i: (0, 0)),    # weight, resident
            pl.BlockSpec((1, Hp), lambda i: (0, 0)),     # bias (f32), resident
        ]
        out_specs = pl.BlockSpec((tm, Hp), lambda i: (i, 0))
        dim_sem = ("parallel",)
        bytes_accessed = (M * H * (in_bytes + res_bytes + out_bytes)
                          + Hp * Hp * cbytes + Hp * 4)
    else:
        # 2-D fallback for large H: rows parallel, columns arbitrary with a
        # serpentine order so the weight block stays resident across i -> i+1.
        n_j = Hp // tn

        def _serp(i, j):
            odd = i % 2
            return (1 - odd) * j + odd * (n_j - 1 - j)

        grid = (n_i, n_j)
        in_specs = [
            pl.BlockSpec((tm, Hp), lambda i, j: (i, 0)),            # acts, resident over j
            pl.BlockSpec((tm, tn), lambda i, j: (i, _serp(i, j))),  # residual
            pl.BlockSpec((Hp, tn), lambda i, j: (0, _serp(i, j))),  # weight column block
            pl.BlockSpec((1, tn), lambda i, j: (0, _serp(i, j))),   # bias block
        ]
        out_specs = pl.BlockSpec((tm, tn), lambda i, j: (i, _serp(i, j)))
        dim_sem = ("parallel", "arbitrary")
        bytes_accessed = (Mp * Hp * (in_bytes + res_bytes + out_bytes)
                          + n_i * Hp * Hp * cbytes + n_i * Hp * 4)

    fp = footprint(tm)
    vmem_limit = int(min(vmem_cap - (4 << 20), max(32 << 20, int(fp * 1.5))))

    cost = pl.CostEstimate(
        flops=2 * M * H * H,
        bytes_accessed=int(bytes_accessed),
        transcendentals=0,
    )

    out2d = pl.pallas_call(
        functools.partial(_self_output_kernel, compute_dtype=compute_dtype),
        out_shape=jax.ShapeDtypeStruct((Mp, Hp), out_dtype),
        grid_spec=pltpu.PrefetchScalarGridSpec(
            num_scalar_prefetch=0,
            grid=grid,
            in_specs=in_specs,
            out_specs=out_specs,
        ),
        compiler_params=pltpu.CompilerParams(
            dimension_semantics=dim_sem,
            vmem_limit_bytes=vmem_limit,
        ),
        cost_estimate=cost,
    )(hs2d, res2d, w, b)

    if Mp != M or Hp != H:
        out2d = out2d[:M, :H]
    return out2d.reshape(B, S, H)


def _reference(hidden_states, input_tensor, weight_t, bias):
    # Pure-JAX reference of the same math (dropout = identity in eval).
    return jnp.einsum("bsh,ho->bso", hidden_states, weight_t) + bias + input_tensor


if __name__ == "__main__":
    # Small shapes consistent with the module: batch=2, seq=8, hidden=32.
    B, S, H = 2, 8, 32
    key = jax.random.PRNGKey(0)
    k_hs, k_res, k_w, k_b = jax.random.split(key, 4)

    hidden_states = jax.random.normal(k_hs, (B, S, H), dtype=jnp.float32)
    input_tensor = jax.random.normal(k_res, (B, S, H), dtype=jnp.float32)

    # PyTorch nn.Linear weight is [out, in]; store its transpose [in, out].
    weight = jax.random.normal(k_w, (H, H), dtype=jnp.float32) * 0.02
    weight_t = weight.T
    bias = jax.random.normal(k_b, (H,), dtype=jnp.float32) * 0.02

    # NOTE: dropout(hidden_dropout_prob) is the identity at inference time,
    # so it is intentionally not applied in the kernel.
    # TODO(synk): training-mode dropout would need pltpu.prng_seed/prng_random_bits masking.

    ref = _reference(hidden_states, input_tensor, weight_t, bias)

    # Default path: bf16 streamed through the MXU, f32 accumulation.
    out = jax.block_until_ready(
        groupbert_self_output(hidden_states, input_tensor, weight_t, bias))
    assert out.shape == (B, S, H)
    assert jnp.allclose(out, ref, atol=5e-2, rtol=5e-2), "bf16 default mismatch"

    # Explicit f32 streaming path (default MXU precision; reduced-precision
    # passes are possible on some generations, hence 1e-4 rather than exact).
    out_f32 = jax.block_until_ready(
        groupbert_self_output(hidden_states, input_tensor, weight_t, bias,
                              compute_dtype=jnp.float32))
    assert jnp.allclose(out_f32, ref, atol=1e-4, rtol=1e-4), "f32 mismatch"

    # Exercise the large-H fallback (2-D serpentine grid) at a small size.
    B2, S2, H2 = 2, 16, 256
    k1, k2, k3, k4 = jax.random.split(jax.random.PRNGKey(1), 4)
    hs2 = jax.random.normal(k1, (B2, S2, H2), dtype=jnp.float32)
    res2 = jax.random.normal(k2, (B2, S2, H2), dtype=jnp.float32)
    w2 = (jax.random.normal(k3, (H2, H2), dtype=jnp.float32) * 0.02).T
    b2 = jax.random.normal(k4, (H2,), dtype=jnp.float32) * 0.02
    ref2 = _reference(hs2, res2, w2, b2)
    out2 = jax.block_until_ready(
        groupbert_self_output(hs2, res2, w2, b2,
                              _force_tiled=True, _tm=16, _tn=128))
    assert jnp.allclose(out2, ref2, atol=5e-2, rtol=5e-2), "tiled-path mismatch"

    print("KERNEL_OK")
</pallas_src>

<mosaic_0001>
module attributes {stable_mosaic.version = 11 : i64} {
  func.func @_self_output_kernel(%arg0: i32, %arg1: memref<16x128xf32, #tpu.memory_space<vmem>>, %arg2: memref<16x128xf32, #tpu.memory_space<vmem>>, %arg3: memref<128x128xbf16, #tpu.memory_space<vmem>>, %arg4: memref<1x128xf32, #tpu.memory_space<vmem>>, %arg5: memref<16x128xf32, #tpu.memory_space<vmem>>) attributes {dimension_semantics = [#tpu.dimension_semantics<parallel>], iteration_bounds = array<i64: 1>, scalar_prefetch = 0 : i64, scratch_operands = 0 : i64, tpu.core_type = #tpu.core_type<tc>, window_params = [{transform_indices = @transform_0, window_bounds = array<i64: 16, 128>}, {transform_indices = @transform_1, window_bounds = array<i64: 16, 128>}, {pipeline_mode = #tpu.pipeline_mode<synchronous>, transform_indices = @transform_2, window_bounds = array<i64: 128, 128>}, {pipeline_mode = #tpu.pipeline_mode<synchronous>, transform_indices = @transform_3, window_bounds = array<i64: 1, 128>}, {transform_indices = @transform_4, window_bounds = array<i64: 16, 128>}]} {
    %c0 = arith.constant 0 : index
    %c0_0 = arith.constant 0 : index
    %0 = vector.load %arg1[%c0, %c0_0] : memref<16x128xf32, #tpu.memory_space<vmem>>, vector<16x128xf32>
    %1 = arith.truncf %0 : vector<16x128xf32> to vector<16x128xbf16>
    %c0_1 = arith.constant 0 : index
    %c0_2 = arith.constant 0 : index
    %2 = vector.load %arg3[%c0_1, %c0_2] : memref<128x128xbf16, #tpu.memory_space<vmem>>, vector<128x128xbf16>
    %cst = arith.constant dense<0.000000e+00> : vector<16x128xf32>
    %3 = tpu.matmul %1, %2, %cst {dimension_numbers = #tpu.dot_dimension_numbers<[1], [0], [0], [1], [0, 0, 1, 1], [], []>} : vector<16x128xbf16>, vector<128x128xbf16>, vector<16x128xf32> -> vector<16x128xf32>
    %c0_3 = arith.constant 0 : index
    %c0_4 = arith.constant 0 : index
    %4 = vector.load %arg4[%c0_3, %c0_4] : memref<1x128xf32, #tpu.memory_space<vmem>>, vector<1x128xf32>
    %5 = vector.broadcast %4 : vector<1x128xf32> to vector<16x128xf32>
    %6 = arith.addf %3, %5 : vector<16x128xf32>
    %c0_5 = arith.constant 0 : index
    %c0_6 = arith.constant 0 : index
    %7 = vector.load %arg2[%c0_5, %c0_6] : memref<16x128xf32, #tpu.memory_space<vmem>>, vector<16x128xf32>
    %8 = arith.addf %6, %7 : vector<16x128xf32>
    %c0_7 = arith.constant 0 : index
    %c0_8 = arith.constant 0 : index
    %9 = vector.load %arg5[%c0_7, %c0_8] : memref<16x128xf32, #tpu.memory_space<vmem>>, vector<16x128xf32>
    tpu.vector_store %arg5[%c0_7, %c0_8], %8 {strides = array<i32>} : memref<16x128xf32, #tpu.memory_space<vmem>>, vector<16x128xf32>,
    return
  }
  func.func @transform_0(%arg0: i32) -> (i32, i32) {
    %c0_i32 = arith.constant 0 : i32
    %c0_i32_0 = arith.constant 0 : i32
    return %arg0, %c0_i32 : i32, i32
  }
  func.func @transform_1(%arg0: i32) -> (i32, i32) {
    %c0_i32 = arith.constant 0 : i32
    %c0_i32_0 = arith.constant 0 : i32
    return %arg0, %c0_i32 : i32, i32
  }
  func.func @transform_2(%arg0: i32) -> (i32, i32) {
    %c0_i32 = arith.constant 0 : i32
    %c0_i32_0 = arith.constant 0 : i32
    %c0_i32_1 = arith.constant 0 : i32
    return %c0_i32, %c0_i32_0 : i32, i32
  }
  func.func @transform_3(%arg0: i32) -> (i32, i32) {
    %c0_i32 = arith.constant 0 : i32
    %c0_i32_0 = arith.constant 0 : i32
    %c0_i32_1 = arith.constant 0 : i32
    return %c0_i32, %c0_i32_0 : i32, i32
  }
  func.func @transform_4(%arg0: i32) -> (i32, i32) {
    %c0_i32 = arith.constant 0 : i32
    %c0_i32_0 = arith.constant 0 : i32
    return %arg0, %c0_i32 : i32, i32
  }
}

</mosaic_0001>

<llo_original>
// kernel: tpu_custom_call.1
$region0: #{tpu_custom_call.1}
  #allocation0 [shape = 'u32[]', space=smem, size = 0x4, offset = 0x4, fixed_abs, tag = 'smem constant byte address 0x4 - core index']
  #allocation1 [shape = 'u32[144,128]{1,0:T(1,128)}', space=vmem, size = 0x12000, scoped, tag = 'internal scratch']
  %s0 = inlined_call_operand.hbm [shape: f32[16,128], index: 0, kind: input, shape index: {}]
  %s1 = inlined_call_operand.hbm [shape: f32[16,128], index: 1, kind: input, shape index: {}]
  %s2 = inlined_call_operand.hbm [shape: bf16[128,128], index: 2, kind: input, shape index: {}]
  %s3 = inlined_call_operand.vmem [shape: f32[1,128], index: 3, kind: input, shape index: {}]
  %s4 = inlined_call_operand.hbm [shape: f32[16,128], index: 4, kind: output, shape index: {}]
  %s5 = sld [smem:[#allocation0]]
  $region38: #{tpu_custom_call.1} parent=0
    _
  %s7 = ssub.s32 1, %s5
  %s8 = scalar_select 0, %s7, %s5
  $region1: #{tpu_custom_call.1} parent=0
    #allocation2 [shape = 'u8[8192]{0}', space=vmem, size = 0x2000, scoped, tag = 'input window, operand 0, single buffered']
    #allocation3 [shape = 's32[1]{0}', space=sflag, size = 0x4, scoped, tag = 'scoped memory for tpu_custom_call.1']
    #allocation4 [shape = 's32[1]{0}', space=sflag, size = 0x4, scoped, tag = 'scoped memory for tpu_custom_call.1']
    #allocation5 [shape = 'u8[8192]{0}', space=vmem, size = 0x2000, scoped, tag = 'input window, operand 1, single buffered']
    #allocation6 [shape = 's32[1]{0}', space=sflag, size = 0x4, scoped, tag = 'scoped memory for tpu_custom_call.1']
    #allocation7 [shape = 'u8[32768]{0}', space=vmem, size = 0x8000, scoped, tag = 'input window, operand 2, single buffered']
    #allocation8 [shape = 'u8[8192]{0}', space=vmem, size = 0x2000, scoped, tag = 'output window, operand 0, single buffered']
    %9 = vsyncpa [#allocation3], 0
    %10 = vsyncpa [#allocation6], 0
    %11 = vsyncpa [#allocation4], 0
    // Predicated region
    $region2: #{tpu_custom_call.1} parent=1 // pred_check
      _
    $region3: #{tpu_custom_call.1} parent=1 // pred_check_branch
      %13 = sbr.rel (0) target = $region5
    $region4: #{tpu_custom_call.1} parent=1 // pred_region
      %s15 = ssub.s32 256, 256
      %16 = vsyncadd [#allocation3], %s15
      %s17 = sshll.u32 [#allocation2], 4
      %s18 = int_to_ptr.vmem [resolvable:$true] %s17
      %23 = dma.hbm_to_vmem [thread:$0]  %s0, 256, %s18, [#allocation3], 128, 128, 8
    $region5: #{tpu_custom_call.1} parent=1 // pred_fallthru
      _
    // Predicated region
    $region6: #{tpu_custom_call.1} parent=1 // pred_check
      _
    $region7: #{tpu_custom_call.1} parent=1 // pred_check_branch
      %25 = sbr.rel (0) target = $region9
    $region8: #{tpu_custom_call.1} parent=1 // pred_region
      %s27 = ssub.s32 256, 256
      %28 = vsyncadd [#allocation6], %s27
      %s29 = sshll.u32 [#allocation5], 4
      %s30 = int_to_ptr.vmem [resolvable:$true] %s29
      %35 = dma.hbm_to_vmem [thread:$0]  %s1, 256, %s30, [#allocation6], 128, 128, 8
    $region9: #{tpu_custom_call.1} parent=1 // pred_fallthru
      _
    // Predicated region
    $region10: #{tpu_custom_call.1} parent=1 // pred_check
      _
    $region11: #{tpu_custom_call.1} parent=1 // pred_check_branch
      %37 = sbr.rel (0) target = $region13
    $region12: #{tpu_custom_call.1} parent=1 // pred_region
      %s39 = ssub.s32 1024, 1024
      %40 = vsyncadd [#allocation6], %s39
      %s41 = sshll.u32 [#allocation7], 4
      %s42 = int_to_ptr.vmem [resolvable:$true] %s41
      %47 = dma.hbm_to_vmem [thread:$0]  %s2, 1024, %s42, [#allocation6], 64, 64, 4
    $region13: #{tpu_custom_call.1} parent=1 // pred_fallthru
      _
    // Predicated region
    $region14: #{tpu_custom_call.1} parent=1 // pred_check
      _
    $region15: #{tpu_custom_call.1} parent=1 // pred_check_branch
      %49 = sbr.rel (0) target = $region17
    $region16: #{tpu_custom_call.1} parent=1 // pred_region
      _
    $region17: #{tpu_custom_call.1} parent=1 // pred_fallthru
      _
    // Predicated region
    $region18: #{tpu_custom_call.1} parent=1 // pred_check
      _
    $region19: #{tpu_custom_call.1} parent=1 // pred_check_branch
      %51 = sbr.rel (0) target = $region21
    $region20: #{tpu_custom_call.1} parent=1 // pred_region
      %52 = dma.done [#allocation3], 256
    $region21: #{tpu_custom_call.1} parent=1 // pred_fallthru
      _
    // Predicated region
    $region22: #{tpu_custom_call.1} parent=1 // pred_check
      _
    $region23: #{tpu_custom_call.1} parent=1 // pred_check_branch
      %54 = sbr.rel (0) target = $region25
    $region24: #{tpu_custom_call.1} parent=1 // pred_region
      %55 = dma.done [#allocation6], 256
    $region25: #{tpu_custom_call.1} parent=1 // pred_fallthru
      _
    // Predicated region
    $region26: #{tpu_custom_call.1} parent=1 // pred_check
      _
    $region27: #{tpu_custom_call.1} parent=1 // pred_check_branch
      %57 = sbr.rel (0) target = $region29
    $region28: #{tpu_custom_call.1} parent=1 // pred_region
      %58 = dma.done [#allocation6], 1024
    $region29: #{tpu_custom_call.1} parent=1 // pred_fallthru
      _
    %v60 = vld [vmem:[#allocation2] sm:$0xff]
    %v61 = vld [vmem:[#allocation2 + $0x8] sm:$0xff]
    %v62 = vpack.c.bf16 %v61, %v60
    %v63 = vld [vmem:[#allocation7] sm:$0xf]
    %v64 = vld [vmem:[#allocation7 + $0x4] sm:$0xf]
    %v65 = vld [vmem:[#allocation7 + $0x8] sm:$0xf]
    %v66 = vld [vmem:[#allocation7 + $0xc] sm:$0xf]
    %v67 = vld [vmem:[#allocation7 + $0x10] sm:$0xf]
    %v68 = vld [vmem:[#allocation7 + $0x14] sm:$0xf]
    %v69 = vld [vmem:[#allocation7 + $0x18] sm:$0xf]
    %v70 = vld [vmem:[#allocation7 + $0x1c] sm:$0xf]
    %v71 = vld [vmem:[#allocation7 + $0x20] sm:$0xf]
    %v72 = vld [vmem:[#allocation7 + $0x24] sm:$0xf]
    %v73 = vld [vmem:[#allocation7 + $0x28] sm:$0xf]
    %v74 = vld [vmem:[#allocation7 + $0x2c] sm:$0xf]
    %v75 = vld [vmem:[#allocation7 + $0x30] sm:$0xf]
    %v76 = vld [vmem:[#allocation7 + $0x34] sm:$0xf]
    %v77 = vld [vmem:[#allocation7 + $0x38] sm:$0xf]
    %v78 = vld [vmem:[#allocation7 + $0x3c] sm:$0xf]
    %v79 = vld [vmem:[%s3] sm:$0x1]
    %v81 = vlaneseq
    %v82 = vshrl.u32 %v81, 7
    %v83 = vsub.s32 0, %v82
    %v84 = vrot.slane %v79, %v83
    %v102 = vunpack.c.l.b16 %v63
    %v103 = vunpack.c.l.b16 %v64
    %v104 = vunpack.c.l.b16 %v65
    %v105 = vunpack.c.l.b16 %v66
    %v106 = vunpack.c.l.b16 %v67
    %v107 = vunpack.c.l.b16 %v68
    %v108 = vunpack.c.l.b16 %v69
    %v109 = vunpack.c.l.b16 %v70
    %v110 = vunpack.c.l.b16 %v71
    %v111 = vunpack.c.l.b16 %v72
    %v112 = vunpack.c.l.b16 %v73
    %v113 = vunpack.c.l.b16 %v74
    %v114 = vunpack.c.l.b16 %v75
    %v115 = vunpack.c.l.b16 %v76
    %v116 = vunpack.c.l.b16 %v77
    %v117 = vunpack.c.l.b16 %v78
    %v118 = vpack.c.b16 %v103, %v102
    %v119 = vpack.c.b16 %v105, %v104
    %v120 = vpack.c.b16 %v107, %v106
    %v121 = vpack.c.b16 %v109, %v108
    %v122 = vpack.c.b16 %v111, %v110
    %v123 = vpack.c.b16 %v113, %v112
    %v124 = vpack.c.b16 %v115, %v114
    %v125 = vpack.c.b16 %v117, %v116
    %134 = vmatprep.subr.bf16.mxu0 0
    %135 = vmatpush1.bf16.msra.mxu0 %v118
    %136 = vmatprep.subr.bf16.mxu0 0
    %137 = vmatpush1.bf16.msra.mxu0 %v119
    %138 = vmatprep.subr.bf16.mxu0 0
    %139 = vmatpush1.bf16.msra.mxu0 %v120
    %140 = vmatprep.subr.bf16.mxu0 0
    %141 = vmatpush1.bf16.msra.mxu0 %v121
    %142 = vmatprep.subr.bf16.mxu0 0
    %143 = vmatpush1.bf16.msra.mxu0 %v122
    %144 = vmatprep.subr.bf16.mxu0 0
    %145 = vmatpush1.bf16.msra.mxu0 %v123
    %146 = vmatprep.subr.bf16.mxu0 0
    %147 = vmatpush1.bf16.msra.mxu0 %v124
    %148 = vmatprep.subr.bf16.mxu0 0
    %149 = vmatpush1.bf16.msra.mxu0 %v125
    %150 = vmatprep.subr.bf16.mxu0 0
    %151 = vmatpush1.bf16.msra.mxu0 0
    %152 = vmatprep.subr.bf16.mxu0 0
    %153 = vmatpush1.bf16.msra.mxu0 0
    %154 = vmatprep.subr.bf16.mxu0 0
    %155 = vmatpush1.bf16.msra.mxu0 0
    %156 = vmatprep.subr.bf16.mxu0 0
    %157 = vmatpush1.bf16.msra.mxu0 0
    %158 = vmatprep.subr.bf16.mxu0 0
    %159 = vmatpush1.bf16.msra.mxu0 0
    %160 = vmatprep.subr.bf16.mxu0 0
    %161 = vmatpush1.bf16.msra.mxu0 0
    %162 = vmatprep.subr.bf16.mxu0 0
    %163 = vmatpush1.bf16.msra.mxu0 0
    %164 = vmatprep.subr.bf16.mxu0 0
    %165 = vmatpush1.bf16.msra.mxu0 0
    %166 = vmatprep.mubr.bf16.mxu0 0
    %167 = vmatmul.mubr.bf16.gmra.mrb[0].mxu0 %v62
    %v168 = vpop.f32.mrb[0].mxu0
    %v169 = vadd.f32 %v84, %v168
    %v170 = vpop.f32.mrb[0].mxu0
    %v171 = vpop.f32.mrb[0].mxu0
    %v172 = vadd.f32 %v84, %v171
    %v173 = vpop.f32.mrb[0].mxu0
    %174 = vdwg.mxu0
    %v175 = vld [vmem:[#allocation5] sm:$0xff]
    %v176 = vld [vmem:[#allocation5 + $0x8] sm:$0xff]
    %v177 = vadd.f32 %v169, %v175
    %v178 = vadd.f32 %v172, %v176
    %179 = vst [vmem:[#allocation8] sm:$0xff] %v177
    %180 = vst [vmem:[#allocation8 + $0x8] sm:$0xff] %v178
    // Predicated region
    $region30: #{tpu_custom_call.1} parent=1 // pred_check
      _
    $region31: #{tpu_custom_call.1} parent=1 // pred_check_branch
      %182 = sbr.rel (0) target = $region33
    $region32: #{tpu_custom_call.1} parent=1 // pred_region
      %s184 = ssub.s32 256, 256
      %185 = vsyncadd [#allocation4], %s184
      %s186 = sshll.u32 [#allocation8], 4
      %s187 = int_to_ptr.vmem [resolvable:$true] %s186
      %192 = dma.vmem_to_hbm [thread:$0]  %s187, 256, %s4, [#allocation4], 128, 128, 8
    $region33: #{tpu_custom_call.1} parent=1 // pred_fallthru
      _
    // Predicated region
    $region34: #{tpu_custom_call.1} parent=1 // pred_check
      _
    $region35: #{tpu_custom_call.1} parent=1 // pred_check_branch
      %194 = sbr.rel (0) target = $region37
    $region36: #{tpu_custom_call.1} parent=1 // pred_region
      %195 = dma.done [#allocation4], 256
    $region37: #{tpu_custom_call.1} parent=1 // pred_fallthru
      _
    %196 = vsyncpa [#allocation3], 1
    %197 = vsyncpa [#allocation6], 1
    %198 = vsyncpa [#allocation4], 1

</llo_original>
